<compile_context>
chip_gen: v5e
topology: v5e:2x2
jax: 0.10.0
libtpu: 0.0.40
codegen_flags: <defaults>
</compile_context>

<pallas_src>
import functools

import jax
import jax.numpy as jnp
from jax import lax
from jax.experimental import pallas as pl
from jax.experimental.pallas import tpu as pltpu

_MIB = 1024 * 1024


def _regression_head_kernel(x_ref, w1_ref, b1_ref, w2_ref, b2_ref, o_ref, acc_ref,
                            *, seq_len, needs_mask):
    # x_ref:  [b_tile, s_tile, H]   w1_ref: [H, H]  b1_ref: [1, H]
    # w2_ref: [H, C]  b2_ref: [1, C] o_ref: [b_tile, C]
    # acc_ref: [b_tile, H] f32 scratch accumulator
    s = pl.program_id(1)                 # sequence (reduction) axis, innermost
    last_s = pl.num_programs(1) - 1

    @pl.when(s == 0)
    def _init():
        acc_ref[...] = jnp.zeros_like(acc_ref)

    if needs_mask:
        # Only the LAST sequence tile is ragged -> pay the mask only there.
        @pl.when(s != last_s)
        def _full_tile():
            acc_ref[...] += jnp.sum(x_ref[...], axis=1, dtype=jnp.float32)

        @pl.when(s == last_s)
        def _ragged_tile():
            x = x_ref[...]
            s_tile = x_ref.shape[1]
            remaining = seq_len - s * s_tile          # valid rows in this tile
            row = lax.broadcasted_iota(jnp.int32, (1, s_tile, 1), 1)
            x = jnp.where(row < remaining, x, jnp.zeros((), x.dtype))
            acc_ref[...] += jnp.sum(x, axis=1, dtype=jnp.float32)
    else:
        acc_ref[...] += jnp.sum(x_ref[...], axis=1, dtype=jnp.float32)

    @pl.when(s == last_s)
    def _finalize():
        pooled = acc_ref[...] * jnp.float32(1.0 / seq_len)     # mean(1)
        # H/C are far below the MXU tile; these matmuls run exactly once per batch
        # tile -- the kernel is x-streaming (HBM) bound.
        h = jnp.dot(pooled.astype(w1_ref.dtype), w1_ref[...],
                    preferred_element_type=jnp.float32) + b1_ref[...].astype(jnp.float32)
        h = jnp.tanh(h)
        y = jnp.dot(h.astype(w2_ref.dtype), w2_ref[...],
                    preferred_element_type=jnp.float32) + b2_ref[...].astype(jnp.float32)
        o_ref[...] = y.astype(o_ref.dtype)


def _make_spec(block_shape, index_map, buffers=None):
    """BlockSpec helper: request an explicit pipeline buffer count when supported."""
    if buffers is not None and hasattr(pl, "Buffered"):
        try:
            return pl.BlockSpec(block_shape, index_map,
                                pipeline_mode=pl.Buffered(buffers))
        except TypeError:
            pass  # older pallas without pipeline_mode kwarg -> default buffering
    return pl.BlockSpec(block_shape, index_map)


def _physical_vmem_bytes():
    """Per-core VMEM capacity (generation-aware), conservative fallback = v7x."""
    try:
        info = pltpu.get_tpu_info()
        return int(getattr(info, "vmem_capacity_bytes", 64 * _MIB))
    except Exception:
        return 64 * _MIB


def regression_head_forward(sequence_output, params, *, stop_grad=True,
                            s_tile=None, weights_dtype=None):
    """sequence_output: [B, S, H] -> [B, out_channels] float32."""
    if stop_grad:
        sequence_output = lax.stop_gradient(sequence_output)

    w1, b1, w2, b2 = params["w1"], params["b1"], params["w2"], params["b2"]
    if weights_dtype is not None:
        # Optional (e.g. jnp.bfloat16 on v7x): halves resident weight VMEM; the
        # once-per-batch-tile matmuls then use the native bf16 MXU path.
        w1, b1, w2, b2 = (w1.astype(weights_dtype), b1.astype(weights_dtype),
                          w2.astype(weights_dtype), b2.astype(weights_dtype))

    B, S, H = sequence_output.shape
    C = w2.shape[1]
    b1_2d = b1.reshape(1, H)
    b2_2d = b2.reshape(1, C)

    x_itemsize = jnp.dtype(sequence_output.dtype).itemsize
    w_itemsize = jnp.dtype(w1.dtype).itemsize

    # --- batch tile (outermost, "parallel" grid axis) ---
    if B <= 8:
        b_tile = B                      # full-extent block (always legal)
    elif B < 16:
        b_tile = B
    else:
        # Split the batch into >= 2 programs so both v7x TensorCores stream x.
        b_tile = min(128, pl.cdiv(B, 2))
        b_tile = max(8, (b_tile // 8) * 8)

    # --- sequence tile (reduction axis): multiple of 8, or the full extent ---
    auto_s = s_tile is None
    if auto_s:
        target_bytes = 8 * _MIB         # ~8 MiB per x buffer
        s_tile = max(8, target_bytes // max(1, b_tile * H * x_itemsize))
    s_tile = int(min(S, s_tile))
    if s_tile < S:
        s_tile = max(8, (s_tile // 8) * 8)
        if auto_s and S % s_tile != 0:
            # Prefer a nearby divisor of S (multiple of 8): ragged mask never runs.
            for cand in range(s_tile, max(7, s_tile // 2), -8):
                if S % cand == 0:
                    s_tile = cand
                    break
    if s_tile >= S or S <= 8:
        s_tile = S

    n_b = pl.cdiv(B, b_tile)
    n_s = pl.cdiv(S, s_tile)
    grid = (n_b, n_s)
    needs_mask = (S % s_tile) != 0

    # Deepen the x pipeline only when the sequence sweep actually has >= 3 steps.
    x_buffers = 3 if n_s >= 3 else None

    # --- VMEM budget: buffered x tiles + single-buffered weights + acc + out ---
    x_buf = b_tile * s_tile * H * x_itemsize
    w_buf = (H * H + H + H * C + C) * w_itemsize
    est = (x_buffers or 2) * x_buf + w_buf + 2 * b_tile * C * 4 + b_tile * H * 4
    cap = max(int(0.85 * _physical_vmem_bytes()), 32 * _MIB)   # generation-aware
    vmem_limit = int(min(max(2 * est, 32 * _MIB), cap))

    flops = 2 * B * S * H + 2 * B * H * H + 2 * B * H * C
    bytes_accessed = (B * S * H * x_itemsize
                      + (H * H + H + H * C + C) * w_itemsize
                      + B * C * 4)

    kernel = functools.partial(_regression_head_kernel,
                               seq_len=S, needs_mask=needs_mask)

    return pl.pallas_call(
        kernel,
        out_shape=jax.ShapeDtypeStruct((B, C), jnp.float32),
        grid_spec=pltpu.PrefetchScalarGridSpec(
            num_scalar_prefetch=0,
            grid=grid,
            in_specs=[
                _make_spec((b_tile, s_tile, H), lambda b, s: (b, s, 0), x_buffers),
                _make_spec((H, H), lambda b, s: (0, 0), 1),
                _make_spec((1, H), lambda b, s: (0, 0), 1),
                _make_spec((H, C), lambda b, s: (0, 0), 1),
                _make_spec((1, C), lambda b, s: (0, 0), 1),
            ],
            out_specs=pl.BlockSpec((b_tile, C), lambda b, s: (b, 0)),
            scratch_shapes=[pltpu.VMEM((b_tile, H), jnp.float32)],
        ),
        compiler_params=pltpu.CompilerParams(
            dimension_semantics=("parallel", "arbitrary"),
            vmem_limit_bytes=vmem_limit),
        cost_estimate=pl.CostEstimate(
            flops=flops, transcendentals=B * H, bytes_accessed=bytes_accessed),
    )(sequence_output, w1, b1_2d, w2, b2_2d)


def init_params(key, hidden_size, out_channels):
    """Deterministic synthetic init (PyTorch Linear-style uniform bounds)."""
    k1, k2, k3, k4 = jax.random.split(key, 4)
    bound = 1.0 / (hidden_size ** 0.5)
    return {
        "w1": jax.random.uniform(k1, (hidden_size, hidden_size), jnp.float32,
                                 -bound, bound),
        "b1": jax.random.uniform(k2, (hidden_size,), jnp.float32, -bound, bound),
        "w2": jax.random.uniform(k3, (hidden_size, out_channels), jnp.float32,
                                 -bound, bound),
        "b2": jax.random.uniform(k4, (out_channels,), jnp.float32, -bound, bound),
    }


def _reference(sequence_output, params):
    pooled = jnp.mean(sequence_output, axis=1)
    h = jnp.tanh(pooled @ params["w1"] + params["b1"])
    return h @ params["w2"] + params["b2"]


if __name__ == "__main__":
    key = jax.random.PRNGKey(0)
    k_x, k_p, k_x2, k_p2 = jax.random.split(key, 4)

    # --- Test 1: small f32 case, multi-step sequence reduction (grid = (1, 2)). ---
    B, S, H, C = 2, 16, 32, 4
    x = jax.random.normal(k_x, (B, S, H), jnp.float32)
    params = init_params(k_p, H, C)
    ref = _reference(x, params)

    out = regression_head_forward(x, params, stop_grad=True, s_tile=8)
    out = jax.block_until_ready(out)
    assert out.shape == (B, C)
    assert jnp.allclose(out, ref, atol=1e-5, rtol=1e-5), (out, ref)

    # --- Test 2: default (auto) tiling path (single seq step). ---
    out2 = jax.block_until_ready(regression_head_forward(x, params, stop_grad=True))
    assert jnp.allclose(out2, ref, atol=1e-5, rtol=1e-5), (out2, ref)

    # --- Test 3: bf16 activations, B % b_tile != 0 (ragged batch tile discarded at
    #     writeback), ragged last seq tile (masked path), >1 batch program. ---
    B2, S2, H2, C2 = 20, 20, 128, 8
    x2 = jax.random.normal(k_x2, (B2, S2, H2), jnp.float32).astype(jnp.bfloat16)
    params2 = init_params(k_p2, H2, C2)
    ref2 = _reference(x2.astype(jnp.float32), params2)

    out3 = jax.block_until_ready(
        regression_head_forward(x2, params2, stop_grad=True, s_tile=8))
    assert out3.shape == (B2, C2)
    assert bool(jnp.all(jnp.isfinite(out3)))
    assert jnp.allclose(out3, ref2, atol=5e-3, rtol=5e-3), (out3, ref2)

    print("KERNEL_OK")
</pallas_src>

<mosaic_0001>
module attributes {stable_mosaic.version = 11 : i64} {
  func.func @_regression_head_kernel(%arg0: i32, %arg1: i32, %arg2: memref<2x8x32xf32, #tpu.memory_space<vmem>>, %arg3: memref<32x32xf32, #tpu.memory_space<vmem>>, %arg4: memref<1x32xf32, #tpu.memory_space<vmem>>, %arg5: memref<32x4xf32, #tpu.memory_space<vmem>>, %arg6: memref<1x4xf32, #tpu.memory_space<vmem>>, %arg7: memref<2x4xf32, #tpu.memory_space<vmem>>, %arg8: memref<2x32xf32, #tpu.memory_space<vmem>>) attributes {dimension_semantics = [#tpu.dimension_semantics<parallel>, #tpu.dimension_semantics<arbitrary>], iteration_bounds = array<i64: 1, 2>, scalar_prefetch = 0 : i64, scratch_operands = 1 : i64, tpu.core_type = #tpu.core_type<tc>, window_params = [{transform_indices = @transform_0, window_bounds = array<i64: 2, 8, 32>}, {pipeline_mode = #tpu.pipeline_mode<synchronous>, transform_indices = @transform_1, window_bounds = array<i64: 32, 32>}, {pipeline_mode = #tpu.pipeline_mode<synchronous>, transform_indices = @transform_2, window_bounds = array<i64: 1, 32>}, {pipeline_mode = #tpu.pipeline_mode<synchronous>, transform_indices = @transform_3, window_bounds = array<i64: 32, 4>}, {pipeline_mode = #tpu.pipeline_mode<synchronous>, transform_indices = @transform_4, window_bounds = array<i64: 1, 4>}, {transform_indices = @transform_5, window_bounds = array<i64: 2, 4>}]} {
    %c0_i32 = arith.constant 0 : i32
    %0 = arith.cmpi eq, %arg1, %c0_i32 : i32
    %1 = arith.extui %0 : i1 to i32
    %c0_i32_0 = arith.constant 0 : i32
    %2 = arith.cmpi ne, %1, %c0_i32_0 : i32
    scf.if %2 {
      %cst_8 = arith.constant 0.000000e+00 : f32
      %11 = vector.broadcast %cst_8 : f32 to vector<2x32xf32>
      %c0_9 = arith.constant 0 : index
      %c0_10 = arith.constant 0 : index
      %12 = vector.load %arg8[%c0_9, %c0_10] : memref<2x32xf32, #tpu.memory_space<vmem>>, vector<2x32xf32>
      tpu.vector_store %arg8[%c0_9, %c0_10], %11 {strides = array<i32>} : memref<2x32xf32, #tpu.memory_space<vmem>>, vector<2x32xf32>,
    } else {
    }
    %c0 = arith.constant 0 : index
    %c0_1 = arith.constant 0 : index
    %3 = vector.load %arg8[%c0, %c0_1] : memref<2x32xf32, #tpu.memory_space<vmem>>, vector<2x32xf32>
    %c0_2 = arith.constant 0 : index
    %c0_3 = arith.constant 0 : index
    %c0_4 = arith.constant 0 : index
    %4 = vector.load %arg2[%c0_2, %c0_3, %c0_4] : memref<2x8x32xf32, #tpu.memory_space<vmem>>, vector<2x8x32xf32>
    %cst = arith.constant dense<0.000000e+00> : vector<2x32xf32>
    %5 = vector.multi_reduction <add>, %4, %cst [1] : vector<2x8x32xf32> to vector<2x32xf32>
    %6 = arith.addf %3, %5 : vector<2x32xf32>
    %c0_5 = arith.constant 0 : index
    %c0_6 = arith.constant 0 : index
    %7 = vector.load %arg8[%c0_5, %c0_6] : memref<2x32xf32, #tpu.memory_space<vmem>>, vector<2x32xf32>
    tpu.vector_store %arg8[%c0_5, %c0_6], %6 {strides = array<i32>} : memref<2x32xf32, #tpu.memory_space<vmem>>, vector<2x32xf32>,
    %c1_i32 = arith.constant 1 : i32
    %8 = arith.cmpi eq, %arg1, %c1_i32 : i32
    %9 = arith.extui %8 : i1 to i32
    %c0_i32_7 = arith.constant 0 : i32
    %10 = arith.cmpi ne, %9, %c0_i32_7 : i32
    scf.if %10 {
      %c0_8 = arith.constant 0 : index
      %c0_9 = arith.constant 0 : index
      %11 = vector.load %arg8[%c0_8, %c0_9] : memref<2x32xf32, #tpu.memory_space<vmem>>, vector<2x32xf32>
      %cst_10 = arith.constant 6.250000e-02 : f32
      %12 = vector.broadcast %cst_10 : f32 to vector<2x32xf32>
      %13 = arith.mulf %11, %12 : vector<2x32xf32>
      %c0_11 = arith.constant 0 : index
      %c0_12 = arith.constant 0 : index
      %14 = vector.load %arg3[%c0_11, %c0_12] : memref<32x32xf32, #tpu.memory_space<vmem>>, vector<32x32xf32>
      %cst_13 = arith.constant dense<0.000000e+00> : vector<2x32xf32>
      %15 = tpu.matmul %13, %14, %cst_13 {dimension_numbers = #tpu.dot_dimension_numbers<[1], [0], [0], [1], [0, 0, 1, 1], [], []>} : vector<2x32xf32>, vector<32x32xf32>, vector<2x32xf32> -> vector<2x32xf32>
      %c0_14 = arith.constant 0 : index
      %c0_15 = arith.constant 0 : index
      %16 = vector.load %arg4[%c0_14, %c0_15] : memref<1x32xf32, #tpu.memory_space<vmem>>, vector<1x32xf32>
      %17 = vector.broadcast %16 : vector<1x32xf32> to vector<2x32xf32>
      %18 = arith.addf %15, %17 : vector<2x32xf32>
      %19 = math.tanh %18 : vector<2x32xf32>
      %c0_16 = arith.constant 0 : index
      %c0_17 = arith.constant 0 : index
      %20 = vector.load %arg5[%c0_16, %c0_17] : memref<32x4xf32, #tpu.memory_space<vmem>>, vector<32x4xf32>
      %cst_18 = arith.constant dense<0.000000e+00> : vector<2x4xf32>
      %21 = tpu.matmul %19, %20, %cst_18 {dimension_numbers = #tpu.dot_dimension_numbers<[1], [0], [0], [1], [0, 0, 1, 1], [], []>} : vector<2x32xf32>, vector<32x4xf32>, vector<2x4xf32> -> vector<2x4xf32>
      %c0_19 = arith.constant 0 : index
      %c0_20 = arith.constant 0 : index
      %22 = vector.load %arg6[%c0_19, %c0_20] : memref<1x4xf32, #tpu.memory_space<vmem>>, vector<1x4xf32>
      %23 = vector.broadcast %22 : vector<1x4xf32> to vector<2x4xf32>
      %24 = arith.addf %21, %23 : vector<2x4xf32>
      %c0_21 = arith.constant 0 : index
      %c0_22 = arith.constant 0 : index
      %25 = vector.load %arg7[%c0_21, %c0_22] : memref<2x4xf32, #tpu.memory_space<vmem>>, vector<2x4xf32>
      tpu.vector_store %arg7[%c0_21, %c0_22], %24 {strides = array<i32>} : memref<2x4xf32, #tpu.memory_space<vmem>>, vector<2x4xf32>,
    } else {
    }
    return
  }
  func.func @transform_0(%arg0: i32, %arg1: i32) -> (i32, i32, i32) {
    %c0_i32 = arith.constant 0 : i32
    %c0_i32_0 = arith.constant 0 : i32
    return %arg0, %arg1, %c0_i32 : i32, i32, i32
  }
  func.func @transform_1(%arg0: i32, %arg1: i32) -> (i32, i32) {
    %c0_i32 = arith.constant 0 : i32
    %c0_i32_0 = arith.constant 0 : i32
    %c0_i32_1 = arith.constant 0 : i32
    return %c0_i32, %c0_i32_0 : i32, i32
  }
  func.func @transform_2(%arg0: i32, %arg1: i32) -> (i32, i32) {
    %c0_i32 = arith.constant 0 : i32
    %c0_i32_0 = arith.constant 0 : i32
    %c0_i32_1 = arith.constant 0 : i32
    return %c0_i32, %c0_i32_0 : i32, i32
  }
  func.func @transform_3(%arg0: i32, %arg1: i32) -> (i32, i32) {
    %c0_i32 = arith.constant 0 : i32
    %c0_i32_0 = arith.constant 0 : i32
    %c0_i32_1 = arith.constant 0 : i32
    return %c0_i32, %c0_i32_0 : i32, i32
  }
  func.func @transform_4(%arg0: i32, %arg1: i32) -> (i32, i32) {
    %c0_i32 = arith.constant 0 : i32
    %c0_i32_0 = arith.constant 0 : i32
    %c0_i32_1 = arith.constant 0 : i32
    return %c0_i32, %c0_i32_0 : i32, i32
  }
  func.func @transform_5(%arg0: i32, %arg1: i32) -> (i32, i32) {
    %c0_i32 = arith.constant 0 : i32
    %c0_i32_0 = arith.constant 0 : i32
    return %arg0, %c0_i32 : i32, i32
  }
}

</mosaic_0001>

<llo_original>
// kernel: tpu_custom_call.1
$region0: #{tpu_custom_call.1}
  #allocation0 [shape = 'u32[]', space=smem, size = 0x4, offset = 0x4, fixed_abs, tag = 'smem constant byte address 0x4 - core index']
  #allocation1 [shape = 'u32[72,128]{1,0:T(1,128)}', space=vmem, size = 0x9000, scoped, tag = 'internal scratch']
  #allocation2 [shape = 'f32[2,32]{1,0:T(2,128)}', space=vmem, size = 0x400, scoped, tag = 'scratch operand']
  %s0 = inlined_call_operand.vmem [shape: f32[2,16,32], index: 0, kind: input, shape index: {}]
  %s1 = inlined_call_operand.hbm [shape: f32[32,32], index: 1, kind: input, shape index: {}]
  %s2 = inlined_call_operand.vmem [shape: f32[1,32], index: 2, kind: input, shape index: {}]
  %s3 = inlined_call_operand.vmem [shape: f32[32,4], index: 3, kind: input, shape index: {}]
  %s4 = inlined_call_operand.vmem [shape: f32[1,4], index: 4, kind: input, shape index: {}]
  %s5 = inlined_call_operand.hbm [shape: f32[2,4], index: 5, kind: output, shape index: {}]
  %s6 = sld [smem:[#allocation0]]
  $region103: #{tpu_custom_call.1} parent=0
    _
  %s8 = ssub.s32 1, %s6
  %s9 = scalar_select 0, %s8, %s6
  $region1: #{tpu_custom_call.1} parent=0
    #allocation3 [shape = 'u8[16384]{0}', space=vmem, size = 0x4000, scoped, tag = 'input window, operand 0']
    #allocation4 [shape = 'u8[16384]{0}', space=vmem, size = 0x4000, scoped, tag = 'input window, operand 1, single buffered']
    #allocation5 [shape = 's32[2]{0}', space=sflag, size = 0x8, scoped, tag = 'scoped memory for tpu_custom_call.1']
    #allocation6 [shape = 's32[2]{0}', space=sflag, size = 0x8, scoped, tag = 'scoped memory for tpu_custom_call.1']
    #allocation7 [shape = 'u8[1024]{0}', space=vmem, size = 0x400, scoped, tag = 'output window, operand 0, single buffered']
    %10 = vsyncpa [#allocation5], 0
    %11 = vsyncpa [#allocation6], 0
    loop: start=0, step=1, limit=4
    $region2: #{tpu_custom_call.1} parent=1 // loop_pre_header
      _
    $region3: #{tpu_custom_call.1} parent=1 // loop_header
      %s13 = sphi 0, %s17
      %p14 = scmp.ge.s32.totalorder %s13, 4
      %s20 = sphi 0, %s32
      %s21 = sphi 0, %s28
      %s22 = sphi 0, %s20
      %s23 = sphi 0, %s21
      %s24 = sphi 0, %s22
      %s25 = sphi 0, %s23
      %s37 = sphi 0, %s39
      %s40 = sphi 0, %s37
      %s41 = sphi 0, %s40
      %s57 = sphi 0, %s41
      %s61 = sphi 0, %s61
      %s63 = sphi 0, %s61
      %s64 = sphi 0, %s63
      %s78 = sphi 0, %s64
      %s82 = sphi 0, %s82
      %s84 = sphi 0, %s82
      %s85 = sphi 0, %s84
      %s99 = sphi 0, %s85
      %s103 = sphi 0, %s103
      %s105 = sphi 0, %s103
      %s106 = sphi 0, %s105
      %s120 = sphi 0, %s106
      %s124 = sphi 0, %s124
      %s126 = sphi 0, %s124
      %s127 = sphi 0, %s126
      %s141 = sphi 0, %s127
      %s147 = sphi 0, %s149
      %s150 = sphi 0, %s147
      %s151 = sphi 0, %s150
      %s167 = sphi 0, %s151
    $region4: #{tpu_custom_call.1} parent=1 // loop_header_branch
      %16 = sbr.rel (%p14) target = $region8
    $region5: #{tpu_custom_call.1} parent=1 // loop_body
      %s18 = ssub.s32 %s13, 1
      %s19 = ssub.s32 %s13, 2
      %s26 = sadd.s32 1, %s21
      %p27 = scmp.ge.s32.totalorder %s26, 2
      %s28 = scalar_select %p27, 0, %s26
      %s29 = sadd.s32 1, %s20
      %s30 = scalar_select %p27, %s29, %s20
      %p31 = scmp.ge.s32.totalorder %s30, 1
      %s32 = scalar_select %p31, 0, %s30
      %s33 = ssub.s32 %s20, %s32
      %s34 = ssub.s32 %s21, %s28
      %s35 = sor.u32 %s33, %s34
      %p36 = scmp.eq.s32.totalorder %s35, 0
      %s38 = sadd.s32 %s37, 1
      %s39 = scalar_select %p36, %s37, %s38
      %p42 = pneg %p36
      %p43 = scmp.eq.s32.totalorder %s13, 1
      %p44 = por %p42, %p43
      %p45 = scmp.ne.s32.totalorder %s37, %s40
      %p46 = scmp.eq.s32.totalorder %s13, 0
      %p47 = por %p45, %p46
      %p48 = scmp.ne.s32.totalorder %s37, %s40
      %p49 = scmp.eq.s32.totalorder %s18, 1
      %p50 = por %p48, %p49
      %p51 = scmp.ne.s32.totalorder %s40, %s41
      %p52 = scmp.eq.s32.totalorder %s18, 0
      %p53 = por %p51, %p52
      %p54 = scmp.ne.s32.totalorder %s40, %s41
      %p55 = scmp.eq.s32.totalorder %s19, 1
      %p56 = por %p54, %p55
      %p58 = scmp.ne.s32.totalorder %s41, %s57
      %p59 = scmp.eq.s32.totalorder %s19, 0
      %p60 = por %p58, %p59
      %s62 = sadd.s32 %s61, 1
      %p65 = scmp.eq.s32.totalorder %s13, 1
      %p66 = scmp.ne.s32.totalorder %s61, %s63
      %p67 = scmp.eq.s32.totalorder %s13, 0
      %p68 = por %p66, %p67
      %p69 = scmp.ne.s32.totalorder %s61, %s63
      %p70 = scmp.eq.s32.totalorder %s18, 1
      %p71 = por %p69, %p70
      %p72 = scmp.ne.s32.totalorder %s63, %s64
      %p73 = scmp.eq.s32.totalorder %s18, 0
      %p74 = por %p72, %p73
      %p75 = scmp.ne.s32.totalorder %s63, %s64
      %p76 = scmp.eq.s32.totalorder %s19, 1
      %p77 = por %p75, %p76
      %p79 = scmp.ne.s32.totalorder %s64, %s78
      %p80 = scmp.eq.s32.totalorder %s19, 0
      %p81 = por %p79, %p80
      %s83 = sadd.s32 %s82, 1
      %p86 = scmp.eq.s32.totalorder %s13, 1
      %p87 = scmp.ne.s32.totalorder %s82, %s84
      %p88 = scmp.eq.s32.totalorder %s13, 0
      %p89 = por %p87, %p88
      %p90 = scmp.ne.s32.totalorder %s82, %s84
      %p91 = scmp.eq.s32.totalorder %s18, 1
      %p92 = por %p90, %p91
      %p93 = scmp.ne.s32.totalorder %s84, %s85
      %p94 = scmp.eq.s32.totalorder %s18, 0
      %p95 = por %p93, %p94
      %p96 = scmp.ne.s32.totalorder %s84, %s85
      %p97 = scmp.eq.s32.totalorder %s19, 1
      %p98 = por %p96, %p97
      %p100 = scmp.ne.s32.totalorder %s85, %s99
      %p101 = scmp.eq.s32.totalorder %s19, 0
      %p102 = por %p100, %p101
      %s104 = sadd.s32 %s103, 1
      %p107 = scmp.eq.s32.totalorder %s13, 1
      %p108 = scmp.ne.s32.totalorder %s103, %s105
      %p109 = scmp.eq.s32.totalorder %s13, 0
      %p110 = por %p108, %p109
      %p111 = scmp.ne.s32.totalorder %s103, %s105
      %p112 = scmp.eq.s32.totalorder %s18, 1
      %p113 = por %p111, %p112
      %p114 = scmp.ne.s32.totalorder %s105, %s106
      %p115 = scmp.eq.s32.totalorder %s18, 0
      %p116 = por %p114, %p115
      %p117 = scmp.ne.s32.totalorder %s105, %s106
      %p118 = scmp.eq.s32.totalorder %s19, 1
      %p119 = por %p117, %p118
      %p121 = scmp.ne.s32.totalorder %s106, %s120
      %p122 = scmp.eq.s32.totalorder %s19, 0
      %p123 = por %p121, %p122
      %s125 = sadd.s32 %s124, 1
      %p128 = scmp.eq.s32.totalorder %s13, 1
      %p129 = scmp.ne.s32.totalorder %s124, %s126
      %p130 = scmp.eq.s32.totalorder %s13, 0
      %p131 = por %p129, %p130
      %p132 = scmp.ne.s32.totalorder %s124, %s126
      %p133 = scmp.eq.s32.totalorder %s18, 1
      %p134 = por %p132, %p133
      %p135 = scmp.ne.s32.totalorder %s126, %s127
      %p136 = scmp.eq.s32.totalorder %s18, 0
      %p137 = por %p135, %p136
      %p138 = scmp.ne.s32.totalorder %s126, %s127
      %p139 = scmp.eq.s32.totalorder %s19, 1
      %p140 = por %p138, %p139
      %p142 = scmp.ne.s32.totalorder %s127, %s141
      %p143 = scmp.eq.s32.totalorder %s19, 0
      %p144 = por %p142, %p143
      %s145 = ssub.s32 %s20, %s32
      %p146 = scmp.eq.s32.totalorder %s145, 0
      %s148 = sadd.s32 %s147, 1
      %s149 = scalar_select %p146, %s147, %s148
      %p152 = pneg %p146
      %p153 = scmp.eq.s32.totalorder %s13, 1
      %p154 = por %p152, %p153
      %p155 = scmp.ne.s32.totalorder %s147, %s150
      %p156 = scmp.eq.s32.totalorder %s13, 0
      %p157 = por %p155, %p156
      %p158 = scmp.ne.s32.totalorder %s147, %s150
      %p159 = scmp.eq.s32.totalorder %s18, 1
      %p160 = por %p158, %p159
      %p161 = scmp.ne.s32.totalorder %s150, %s151
      %p162 = scmp.eq.s32.totalorder %s18, 0
      %p163 = por %p161, %p162
      %p164 = scmp.ne.s32.totalorder %s150, %s151
      %p165 = scmp.eq.s32.totalorder %s19, 1
      %p166 = por %p164, %p165
      %p168 = scmp.ne.s32.totalorder %s151, %s167
      %p169 = scmp.eq.s32.totalorder %s19, 0
      %p170 = por %p168, %p169
      %p171 = scmp.le.s32.totalorder 1, %s13
      %p172 = scmp.lt.s32.totalorder %s13, 3
      %p173 = pnand %p171, %p172
      %p174 = pneg %p173
      // Predicated region
      $region9: #{tpu_custom_call.1} parent=5 // pred_check
        _
      $region10: #{tpu_custom_call.1} parent=5 // pred_check_branch
        %176 = sbr.rel (%p173) target = $region12
      $region11: #{tpu_custom_call.1} parent=5 // pred_region
        %s177 = ssub.s32 %s13, 1
        // Predicated region
        $region13: #{tpu_custom_call.1} parent=11 // pred_check
          %p178 = pneg %p74
        $region14: #{tpu_custom_call.1} parent=11 // pred_check_branch
          %180 = sbr.rel (%p178) target = $region16
        $region15: #{tpu_custom_call.1} parent=11 // pred_region
          %182 = vsyncadd [#allocation5], 0
          %s183 = sshll.u32 %s1, 4
          %s184 = int_to_ptr.hbm [resolvable:$true] %s183
          %s185 = sshll.u32 [#allocation4], 4
          %s186 = int_to_ptr.vmem [resolvable:$true] %s185
          %191 = dma.hbm_to_vmem [thread:$0]  %s184, 512, %s186, [#allocation5], 128, 128, 8
        $region16: #{tpu_custom_call.1} parent=11 // pred_fallthru
          _
        // Predicated region
        $region17: #{tpu_custom_call.1} parent=11 // pred_check
          %p192 = pneg %p95
        $region18: #{tpu_custom_call.1} parent=11 // pred_check_branch
          %194 = sbr.rel (%p192) target = $region20
        $region19: #{tpu_custom_call.1} parent=11 // pred_region
          _
        $region20: #{tpu_custom_call.1} parent=11 // pred_fallthru
          _
        // Predicated region
        $region21: #{tpu_custom_call.1} parent=11 // pred_check
          %p195 = pneg %p116
        $region22: #{tpu_custom_call.1} parent=11 // pred_check_branch
          %197 = sbr.rel (%p195) target = $region24
        $region23: #{tpu_custom_call.1} parent=11 // pred_region
          _
        $region24: #{tpu_custom_call.1} parent=11 // pred_fallthru
          _
        // Predicated region
        $region25: #{tpu_custom_call.1} parent=11 // pred_check
          %p198 = pneg %p137
        $region26: #{tpu_custom_call.1} parent=11 // pred_check_branch
          %200 = sbr.rel (%p198) target = $region28
        $region27: #{tpu_custom_call.1} parent=11 // pred_region
          _
        $region28: #{tpu_custom_call.1} parent=11 // pred_fallthru
          _
      $region12: #{tpu_custom_call.1} parent=5 // pred_fallthru
        _
      %p201 = scmp.lt.s32.totalorder %s13, 2
      // Predicated region
      $region29: #{tpu_custom_call.1} parent=5 // pred_check
        %p202 = pneg %p201
      $region30: #{tpu_custom_call.1} parent=5 // pred_check_branch
        %204 = sbr.rel (%p202) target = $region32
      $region31: #{tpu_custom_call.1} parent=5 // pred_region
        // Predicated region
        $region33: #{tpu_custom_call.1} parent=31 // pred_check
          %p205 = pneg %p47
        $region34: #{tpu_custom_call.1} parent=31 // pred_check_branch
          %207 = sbr.rel (%p205) target = $region36
        $region35: #{tpu_custom_call.1} parent=31 // pred_region
          %s208 = sand.u32 %s37, 1
          %s209 = sand.u32 %s37, 1
          %s210 = smul.addr %s209, 16
          %s211 = scalar_lea.vmem [#allocation3], %s210
          %s212 = smul.u32 2, %s20
          %s213 = smul.addr %s212, 2
          %s214 = sadd.s32 %s21, %s213
          %s215 = smul.addr %s214, 8
          %s216 = scalar_lea.vmem %s0, %s215
          // Predicated region
          $region37: #{tpu_custom_call.1} parent=35 // pred_check
            _
          $region38: #{tpu_custom_call.1} parent=35 // pred_check_branch
            %218 = sbr.rel (0) target = $region40
          $region39: #{tpu_custom_call.1} parent=35 // pred_region
            // Predicated region
            $region41: #{tpu_custom_call.1} parent=39 // pred_check
              _
            $region42: #{tpu_custom_call.1} parent=39 // pred_check_branch
              %220 = sbr.rel (0) target = $region44
            $region43: #{tpu_custom_call.1} parent=39 // pred_region
              // Predicated region
              $region56: #{tpu_custom_call.1} parent=43 // pred_check
                _
              $region57: #{tpu_custom_call.1} parent=43 // pred_check_branch
                %238 = sbr.rel (0) target = $region59
              $region58: #{tpu_custom_call.1} parent=43 // pred_region
                loop: start=0, step=1, limit=1
                $region60: #{tpu_custom_call.1} parent=58 // loop_pre_header
                  _
                $region61: #{tpu_custom_call.1} parent=58 // loop_header
                  %s240 = sphi 0, %s244
                  %p241 = scmp.ge.s32.totalorder %s240, 1
                  %s245 = sphi %s216, %s216
                  %s246 = sphi %s211, %s211
                $region62: #{tpu_custom_call.1} parent=58 // loop_header_branch
                  %243 = sbr.rel (%p241) target = $region66
                $region63: #{tpu_custom_call.1} parent=58 // loop_body
                  %v247 = vld [vmem:[%s245] sm:$0xff]
                  %248 = vst [vmem:[%s246] sm:$0xff] %v247
                  %v249 = vld [vmem:[%s245 + $0x10] sm:$0xff]
                  %250 = vst [vmem:[%s246 + $0x8] sm:$0xff] %v249
                $region64: #{tpu_custom_call.1} parent=58 // loop_footer
                  %s244 = sadd.s32 1, %s240
                $region65: #{tpu_custom_call.1} parent=58 // loop_footer_branch
                  %239 = sbr.rel target = $region61
                $region66: #{tpu_custom_call.1} parent=58 // loop_exit
                  _
              $region59: #{tpu_custom_call.1} parent=43 // pred_fallthru
                _
              // Predicated region
              $region67: #{tpu_custom_call.1} parent=43 // pred_check
                _
              $region68: #{tpu_custom_call.1} parent=43 // pred_check_branch
                %252 = sbr.rel target = $region70
              $region69: #{tpu_custom_call.1} parent=43 // pred_region
                _
              $region70: #{tpu_custom_call.1} parent=43 // pred_fallthru
                _
            $region44: #{tpu_custom_call.1} parent=39 // pred_fallthru
              _
            // Predicated region
            $region45: #{tpu_custom_call.1} parent=39 // pred_check
              _
            $region46: #{tpu_custom_call.1} parent=39 // pred_check_branch
              %222 = sbr.rel target = $region48
            $region47: #{tpu_custom_call.1} parent=39 // pred_region
              %s224 = ssub.s32 256, 1
              loop: start=0, step=1, limit=1
              $region49: #{tpu_custom_call.1} parent=47 // loop_pre_header
                _
              $region50: #{tpu_custom_call.1} parent=47 // loop_header
                %s226 = sphi 0, %s230
                %p227 = scmp.ge.s32.totalorder %s226, 1
                %s231 = sphi %s216, %s216
                %s232 = sphi %s211, %s211
              $region51: #{tpu_custom_call.1} parent=47 // loop_header_branch
                %229 = sbr.rel (%p227) target = $region55
              $region52: #{tpu_custom_call.1} parent=47 // loop_body
                %v233 = vld [vmem:[%s231] sm:%s224]
                %234 = vst [vmem:[%s232] sm:%s224] %v233
                %v235 = vld [vmem:[%s231 + $0x10] sm:%s224]
                %236 = vst [vmem:[%s232 + $0x8] sm:%s224] %v235
              $region53: #{tpu_custom_call.1} parent=47 // loop_footer
                %s230 = sadd.s32 1, %s226
              $region54: #{tpu_custom_call.1} parent=47 // loop_footer_branch
                %225 = sbr.rel target = $region50
              $region55: #{tpu_custom_call.1} parent=47 // loop_exit
                _
            $region48: #{tpu_custom_call.1} parent=39 // pred_fallthru
              _
          $region40: #{tpu_custom_call.1} parent=35 // pred_fallthru
            _
          %253 = vnop
        $region36: #{tpu_custom_call.1} parent=31 // pred_fallthru
          _
      $region32: #{tpu_custom_call.1} parent=5 // pred_fallthru
        _
      %p254 = scmp.le.s32.totalorder 1, %s13
      %p255 = scmp.lt.s32.totalorder %s13, 3
      %p256 = pnand %p254, %p255
      %p257 = pneg %p256
      // Predicated region
      $region71: #{tpu_custom_call.1} parent=5 // pred_check
        _
      $region72: #{tpu_custom_call.1} parent=5 // pred_check_branch
        %259 = sbr.rel (%p256) target = $region74
      $region73: #{tpu_custom_call.1} parent=5 // pred_region
        %s260 = ssub.s32 %s13, 1
        %s261 = sand.u32 %s40, 1
        %s262 = sand.u32 %s40, 1
        %s263 = smul.addr %s262, 16
        %s264 = scalar_lea.vmem [#allocation3], %s263
        // Predicated region
        $region75: #{tpu_custom_call.1} parent=73 // pred_check
          %p265 = pneg %p53
        $region76: #{tpu_custom_call.1} parent=73 // pred_check_branch
          %267 = sbr.rel (%p265) target = $region78
        $region77: #{tpu_custom_call.1} parent=73 // pred_region
          _
        $region78: #{tpu_custom_call.1} parent=73 // pred_fallthru
          _
        // Predicated region
        $region79: #{tpu_custom_call.1} parent=73 // pred_check
          %p268 = pneg %p74
        $region80: #{tpu_custom_call.1} parent=73 // pred_check_branch
          %270 = sbr.rel (%p268) target = $region82
        $region81: #{tpu_custom_call.1} parent=73 // pred_region
          %272 = dma.done [#allocation5], 512
        $region82: #{tpu_custom_call.1} parent=73 // pred_fallthru
          _
        %s273 = sand.u32 %s40, 1
        %s274 = sand.u32 %s40, 1
        %s275 = smul.addr %s274, 16
        %s276 = scalar_lea.vmem [#allocation3], %s275
        %p277 = pneg %p53
        %p278 = pneg %p50
        %p279 = pneg %p74
        %p280 = pneg %p71
        %p281 = pneg %p95
        %p282 = pneg %p92
        %p283 = pneg %p116
        %p284 = pneg %p113
        %p285 = pneg %p137
        %p286 = pneg %p134
        %p287 = pneg %p163
        %p288 = pneg %p160
        %s289 = smul.u32 2, %s22
        %p290 = scmp.eq.s32.totalorder %s23, 0
        // Predicated region
        $region83: #{tpu_custom_call.1} parent=73 // pred_check
          %p291 = pneg %p290
        $region84: #{tpu_custom_call.1} parent=73 // pred_check_branch
          %293 = sbr.rel (%p291) target = $region86
        $region85: #{tpu_custom_call.1} parent=73 // pred_region
          %vm294 = vcmask 254976
          %295 = vst.msk [vmem:[#allocation2] sm:$0x3] %vm294, 0.0
        $region86: #{tpu_custom_call.1} parent=73 // pred_fallthru
          _
        %v296 = vld [vmem:[#allocation2] sm:$0x3]
        %v297 = vld [vmem:[%s264] sm:$0xff]
        %v298 = vld [vmem:[%s264 + $0x8] sm:$0xff]
        %vm299 = vcmask 261120
        %v300 = vsel %vm299, %v297, 0.0
        %v301 = vrot.slane %v300, 4
        %v302 = vadd.f32 %v300, %v301
        %v303 = vrot.slane %v302, 2
        %v304 = vadd.f32 %v302, %v303
        %v305 = vrot.slane %v304, 1
        %v306 = vadd.f32 %v304, %v305
        %v307 = vsel %vm299, %v298, 0.0
        %v308 = vrot.slane %v307, 4
        %v309 = vadd.f32 %v307, %v308
        %v310 = vrot.slane %v309, 2
        %v311 = vadd.f32 %v309, %v310
        %v312 = vrot.slane %v311, 1
        %v313 = vadd.f32 %v311, %v312
        %vm316 = vcmask 1041409
        %v317 = vsel %vm316, %v313, %v306
        %v319 = vadd.f32 %v296, %v317
        %vm320 = vcmask 254976
        %321 = vst.msk [vmem:[#allocation2] sm:$0x3] %vm320, %v319
        %p322 = scmp.eq.s32.totalorder %s23, 1
        // Predicated region
        $region87: #{tpu_custom_call.1} parent=73 // pred_check
          %p323 = pneg %p322
        $region88: #{tpu_custom_call.1} parent=73 // pred_check_branch
          %325 = sbr.rel (%p323) target = $region90
        $region89: #{tpu_custom_call.1} parent=73 // pred_region
          %v326 = vld [vmem:[#allocation2] sm:$0x3]
          %v327 = vmul.f32 %v326, 0.0625
          %v328 = vld [vmem:[#allocation4] sm:$0xff]
          %v329 = vld [vmem:[#allocation4 + $0x8] sm:$0xff]
          %v330 = vld [vmem:[#allocation4 + $0x10] sm:$0xff]
          %v331 = vld [vmem:[#allocation4 + $0x18] sm:$0xff]
          %v332 = vld [vmem:[%s2] sm:$0x1]
          %v334 = vperm.slane %v332, 0
          %v337 = vsel %vm299, %v327, 0
          %339 = vmatpush.msra.mxu0 0.0
          %340 = vmatpush.msra.mxu0 0.0
          %341 = vmatpush.msra.mxu0 0.0
          %342 = vmatpush.msra.mxu0 0.0
          %343 = vmatpush.msra.mxu0 0.0
          %344 = vmatpush.msra.mxu0 0.0
          %345 = vmatpush.msra.mxu0 0.0
          %346 = vmatpush.msra.mxu0 0.0
          %347 = vmatpush.msra.mxu0 0.0
          %348 = vmatpush.msra.mxu0 0.0
          %349 = vmatpush.msra.mxu0 0.0
          %350 = vmatpush.msra.mxu0 0.0
          %351 = vmatpush.msra.mxu0 %v331
          %352 = vmatpush.msra.mxu0 %v330
          %353 = vmatpush.msra.mxu0 %v329
          %354 = vmatpush.msra.mxu0 %v328
          %355 = vmatmul.f32.gmra.mxu0 %v337
          %v356 = vpop.f32.mrf.mxu0
          %v357 = vadd.f32 %v334, %v356
          %358 = vdwg.mxu0
          %v359 = vtanh.pop %v357
          %v360 = vld [vmem:[%s3] sm:$0xff]
          %v361 = vld [vmem:[%s3 + $0x8] sm:$0xff]
          %v362 = vld [vmem:[%s3 + $0x10] sm:$0xff]
          %v363 = vld [vmem:[%s3 + $0x18] sm:$0xff]
          %v364 = vld [vmem:[%s4] sm:$0x1]
          %v366 = vperm.slane %v364, 0
          %v369 = vsel %vm299, %v359, 0
          %371 = vmatpush.msra.mxu0 0.0
          %372 = vmatpush.msra.mxu0 0.0
          %373 = vmatpush.msra.mxu0 0.0
          %374 = vmatpush.msra.mxu0 0.0
          %375 = vmatpush.msra.mxu0 0.0
          %376 = vmatpush.msra.mxu0 0.0
          %377 = vmatpush.msra.mxu0 0.0
          %378 = vmatpush.msra.mxu0 0.0
          %379 = vmatpush.msra.mxu0 0.0
          %380 = vmatpush.msra.mxu0 0.0
          %381 = vmatpush.msra.mxu0 0.0
          %382 = vmatpush.msra.mxu0 0.0
          %383 = vmatpush.msra.mxu0 %v363
          %384 = vmatpush.msra.mxu0 %v362
          %385 = vmatpush.msra.mxu0 %v361
          %386 = vmatpush.msra.mxu0 %v360
          %387 = vmatmul.f32.gmra.mxu0 %v369
          %v388 = vpop.f32.mrf.mxu0
          %v389 = vadd.f32 %v366, %v388
          %390 = vdwg.mxu0
          %vm391 = vcmask 25600
          %392 = vst.msk [vmem:[#allocation7] sm:$0x3] %vm391, %v389
        $region90: #{tpu_custom_call.1} parent=73 // pred_fallthru
          _
        // Predicated region
        $region91: #{tpu_custom_call.1} parent=73 // pred_check
          %p393 = pneg %p160
        $region92: #{tpu_custom_call.1} parent=73 // pred_check_branch
          %395 = sbr.rel (%p393) target = $region94
        $region93: #{tpu_custom_call.1} parent=73 // pred_region
          %397 = vsyncadd [#allocation6], 0
          %s398 = smul.addr %s22, 2
          %s399 = scalar_lea.hbm %s5, %s398
          %s401 = sshll.u32 [#allocation7], 4
          %s402 = int_to_ptr.vmem [resolvable:$true] %s401
          %s403 = sshll.u32 %s399, 4
          %s404 = int_to_ptr.hbm [resolvable:$true] %s403
          %406 = dma.vmem_to_hbm [thread:$0]  %s402, 32, %s404, [#allocation6]
        $region94: #{tpu_custom_call.1} parent=73 // pred_fallthru
          _
        // Predicated region
        $region95: #{tpu_custom_call.1} parent=73 // pred_check
          %p407 = pneg %p160
        $region96: #{tpu_custom_call.1} parent=73 // pred_check_branch
          %409 = sbr.rel (%p407) target = $region98
        $region97: #{tpu_custom_call.1} parent=73 // pred_region
          %411 = dma.done [#allocation6], 32
        $region98: #{tpu_custom_call.1} parent=73 // pred_fallthru
          _
      $region74: #{tpu_custom_call.1} parent=5 // pred_fallthru
        _
      %p412 = scmp.le.s32.totalorder 2, %s13
      // Predicated region
      $region99: #{tpu_custom_call.1} parent=5 // pred_check
        %p413 = pneg %p412
      $region100: #{tpu_custom_call.1} parent=5 // pred_check_branch
        %415 = sbr.rel (%p413) target = $region102
      $region101: #{tpu_custom_call.1} parent=5 // pred_region
        %s416 = ssub.s32 %s13, 2
      $region102: #{tpu_custom_call.1} parent=5 // pred_fallthru
        _
    $region6: #{tpu_custom_call.1} parent=1 // loop_footer
      %s17 = sadd.s32 1, %s13
    $region7: #{tpu_custom_call.1} parent=1 // loop_footer_branch
      %12 = sbr.rel target = $region3
    $region8: #{tpu_custom_call.1} parent=1 // loop_exit
      _
    %417 = vsyncpa [#allocation5], 1
    %s418 = scalar_lea.sflag [#allocation5], 1
    %419 = vsyncpa %s418, 1
    %420 = vsyncpa [#allocation6], 1
    %s421 = scalar_lea.sflag [#allocation6], 1
    %422 = vsyncpa %s421, 1

</llo_original>
